<compile_context>
chip_gen: v7x
topology: tpu7x:2x2x1
jax: 0.10.0
libtpu: 0.0.40
codegen_flags: <defaults>
</compile_context>

<pallas_src>
import jax
import jax.numpy as jnp
from jax.experimental import pallas as pl
from jax.experimental.pallas import tpu as pltpu

LANES = 128
TARGET_TILE_BYTES = 2 * 1024 * 1024      # per-input per-grid-step DMA volume
VMEM_LIMIT_BYTES = 32 * 1024 * 1024      # covers 16 MiB double-buffered tiles + slack


def _cdiv(a, b):
    return -(-a // b)


def _round_up(x, m):
    return _cdiv(x, m) * m


def _smooth_l1_kernel(d0_ref, d1_ref, d2_ref, t_ref, acc_ref):
    # Grid = (splits, tiles_per_split); axis 1 is the reduction ("arbitrary") axis.
    i = pl.program_id(1)

    @pl.when(i == 0)
    def _():
        acc_ref[...] = jnp.zeros_like(acc_ref)

    t = t_ref[...].astype(jnp.float32)

    def partial_sum(d_ref):
        # smooth L1, beta = 1.0, select-free:
        #   m = min(|x|, 1);  m*(|x| - 0.5*m) == 0.5*x^2 if |x|<1 else |x|-0.5
        diff = d_ref[...].astype(jnp.float32) - t
        ad = jnp.abs(diff)
        m = jnp.minimum(ad, 1.0)
        v = m * (ad - 0.5 * m)
        # Sublane-block reduce: pure vreg adds (VPU), no cross-lane work, no big stores.
        return jnp.sum(v.reshape(-1, 8, LANES), axis=0)

    acc_ref[0, 0] += partial_sum(d0_ref)
    acc_ref[0, 1] += partial_sum(d1_ref)
    acc_ref[0, 2] += partial_sum(d2_ref)


def smooth_l1_loss_pallas(disp0, disp1, disp2, target):
    assert disp0.shape == disp1.shape == disp2.shape == target.shape
    n = int(target.size)

    itemsizes = [jnp.dtype(x.dtype).itemsize for x in (disp0, disp1, disp2, target)]
    # Packed-sublane multiple: f32 -> 8, bf16 -> 16, int8/fp8 -> 32.
    sub = max(8, max(32 // s for s in itemsizes))
    max_tile_rows = max(sub,
                        (TARGET_TILE_BYTES // (LANES * max(itemsizes))) // sub * sub)

    rows = _cdiv(n, LANES)
    total_tiles = _cdiv(rows, max_tile_rows)
    # 2-way split of the reduction sweep (one half per TensorCore on v7x).
    splits = 2 if total_tiles >= 2 else 1
    tiles_per_split = _cdiv(total_tiles, splits)
    total_tiles = splits * tiles_per_split
    tile_rows = _round_up(_cdiv(rows, total_tiles), sub)
    padded_rows = total_tiles * tile_rows
    padded_len = padded_rows * LANES

    def prep(x):
        flat = jnp.ravel(x)
        if padded_len != n:
            # Zero padding of both pred and target -> zero contribution to the loss.
            flat = jnp.pad(flat, (0, padded_len - n))
        return flat.reshape(padded_rows, LANES)

    d0, d1, d2, tg = prep(disp0), prep(disp1), prep(disp2), prep(target)

    in_blk = pl.BlockSpec((tile_rows, LANES),
                          lambda c, i: (c * tiles_per_split + i, 0))
    # Output block = per-split accumulators (revisited across the arbitrary axis).
    out_blk = pl.BlockSpec((1, 3, 8, LANES), lambda c, i: (c, 0, 0, 0))

    cost = pl.CostEstimate(
        flops=21 * n,
        transcendentals=0,
        bytes_accessed=n * sum(itemsizes) + splits * 3 * 8 * LANES * 4,
    )

    out = pl.pallas_call(
        _smooth_l1_kernel,
        out_shape=jax.ShapeDtypeStruct((splits, 3, 8, LANES), jnp.float32),
        grid_spec=pltpu.PrefetchScalarGridSpec(
            num_scalar_prefetch=0,
            grid=(splits, tiles_per_split),
            in_specs=[in_blk, in_blk, in_blk, in_blk],
            out_specs=out_blk,
        ),
        compiler_params=pltpu.CompilerParams(
            dimension_semantics=("parallel", "arbitrary"),
            vmem_limit_bytes=VMEM_LIMIT_BYTES),
        cost_estimate=cost,
    )(d0, d1, d2, tg)

    # Tiny epilogue on a (splits, 3, 8, 128) array: cross-lane/-split reduce + 1/N.
    sums = jnp.sum(out, axis=(0, 2, 3)) * (1.0 / float(n))
    return sums[0], sums[1], sums[2]


def _smooth_l1_ref(pred, target):
    diff = pred - target
    ad = jnp.abs(diff)
    v = jnp.where(ad < 1.0, 0.5 * diff * diff, ad - 0.5)
    return jnp.mean(v)


def _check(shape, key, tol):
    k0, k1, k2, k3 = jax.random.split(key, 4)
    disp0 = jax.random.normal(k0, shape, dtype=jnp.float32) * 2.0
    disp1 = jax.random.normal(k1, shape, dtype=jnp.float32) * 2.0
    disp2 = jax.random.normal(k2, shape, dtype=jnp.float32) * 2.0
    target = jax.random.normal(k3, shape, dtype=jnp.float32) * 2.0

    losses = smooth_l1_loss_pallas(disp0, disp1, disp2, target)
    losses = jax.block_until_ready(losses)

    refs = (_smooth_l1_ref(disp0, target),
            _smooth_l1_ref(disp1, target),
            _smooth_l1_ref(disp2, target))
    for got, ref in zip(losses, refs):
        assert abs(float(got) - float(ref)) < tol, (shape, float(got), float(ref))


if __name__ == "__main__":
    key = jax.random.PRNGKey(0)
    k_small, k_big = jax.random.split(key)

    # Primary small case matching the module's typical (B, H, W) disparity maps.
    _check((2, 16, 16), k_small, tol=1e-5)

    # Moderate case that exercises the multi-tile / 2-way-split reduction path.
    _check((4, 544, 512), k_big, tol=1e-4)

    print("KERNEL_OK")
</pallas_src>

<mosaic_0001>
module attributes {stable_mosaic.version = 11 : i64} {
  func.func @_smooth_l1_kernel(%arg0: i32, %arg1: i32, %arg2: memref<8x128xf32, #tpu.memory_space<vmem>>, %arg3: memref<8x128xf32, #tpu.memory_space<vmem>>, %arg4: memref<8x128xf32, #tpu.memory_space<vmem>>, %arg5: memref<8x128xf32, #tpu.memory_space<vmem>>, %arg6: memref<1x3x8x128xf32, #tpu.memory_space<vmem>>) attributes {dimension_semantics = [#tpu.dimension_semantics<parallel>, #tpu.dimension_semantics<arbitrary>], iteration_bounds = array<i64: 1, 1>, scalar_prefetch = 0 : i64, scratch_operands = 0 : i64, tpu.core_type = #tpu.core_type<tc>, window_params = [{transform_indices = @transform_0, window_bounds = array<i64: 8, 128>}, {transform_indices = @transform_1, window_bounds = array<i64: 8, 128>}, {transform_indices = @transform_2, window_bounds = array<i64: 8, 128>}, {transform_indices = @transform_3, window_bounds = array<i64: 8, 128>}, {transform_indices = @transform_4, window_bounds = array<i64: 1, 3, 8, 128>}]} {
    %c0_i32 = arith.constant 0 : i32
    %0 = arith.cmpi eq, %arg1, %c0_i32 : i32
    %1 = arith.extui %0 : i1 to i32
    %c0_i32_0 = arith.constant 0 : i32
    %2 = arith.cmpi ne, %1, %c0_i32_0 : i32
    scf.if %2 {
      %cst_38 = arith.constant 0.000000e+00 : f32
      %55 = vector.broadcast %cst_38 : f32 to vector<1x3x8x128xf32>
      %c0_39 = arith.constant 0 : index
      %c0_40 = arith.constant 0 : index
      %c0_41 = arith.constant 0 : index
      %c0_42 = arith.constant 0 : index
      %56 = vector.load %arg6[%c0_39, %c0_40, %c0_41, %c0_42] : memref<1x3x8x128xf32, #tpu.memory_space<vmem>>, vector<1x3x8x128xf32>
      tpu.vector_store %arg6[%c0_39, %c0_40, %c0_41, %c0_42], %55 {strides = array<i32>} : memref<1x3x8x128xf32, #tpu.memory_space<vmem>>, vector<1x3x8x128xf32>,
    } else {
    }
    %c0 = arith.constant 0 : index
    %c0_1 = arith.constant 0 : index
    %3 = vector.load %arg5[%c0, %c0_1] : memref<8x128xf32, #tpu.memory_space<vmem>>, vector<8x128xf32>
    %c0_2 = arith.constant 0 : index
    %c0_3 = arith.constant 0 : index
    %c0_4 = arith.constant 0 : index
    %c0_5 = arith.constant 0 : index
    %4 = vector.load %arg6[%c0_2, %c0_3, %c0_4, %c0_5] : memref<1x3x8x128xf32, #tpu.memory_space<vmem>>, vector<1x1x8x128xf32>
    %5 = vector.shape_cast %4 : vector<1x1x8x128xf32> to vector<8x128xf32>
    %c0_6 = arith.constant 0 : index
    %c0_7 = arith.constant 0 : index
    %6 = vector.load %arg2[%c0_6, %c0_7] : memref<8x128xf32, #tpu.memory_space<vmem>>, vector<8x128xf32>
    %7 = arith.subf %6, %3 : vector<8x128xf32>
    %8 = math.absf %7 : vector<8x128xf32>
    %cst = arith.constant 1.000000e+00 : f32
    %9 = vector.broadcast %cst : f32 to vector<8x128xf32>
    %10 = arith.minimumf %8, %9 : vector<8x128xf32>
    %cst_8 = arith.constant 5.000000e-01 : f32
    %11 = vector.broadcast %cst_8 : f32 to vector<8x128xf32>
    %12 = arith.mulf %11, %10 : vector<8x128xf32>
    %13 = arith.subf %8, %12 : vector<8x128xf32>
    %14 = arith.mulf %10, %13 : vector<8x128xf32>
    %15 = vector.shape_cast %14 : vector<8x128xf32> to vector<1x8x128xf32>
    %cst_9 = arith.constant dense<0.000000e+00> : vector<8x128xf32>
    %16 = vector.multi_reduction <add>, %15, %cst_9 [0] : vector<1x8x128xf32> to vector<8x128xf32>
    %17 = arith.addf %5, %16 : vector<8x128xf32>
    %c0_10 = arith.constant 0 : index
    %c0_11 = arith.constant 0 : index
    %c0_12 = arith.constant 0 : index
    %c0_13 = arith.constant 0 : index
    %18 = vector.load %arg6[%c0_10, %c0_11, %c0_12, %c0_13] : memref<1x3x8x128xf32, #tpu.memory_space<vmem>>, vector<1x1x8x128xf32>
    %19 = vector.shape_cast %18 : vector<1x1x8x128xf32> to vector<8x128xf32>
    %20 = vector.shape_cast %17 : vector<8x128xf32> to vector<1x1x8x128xf32>
    tpu.vector_store %arg6[%c0_10, %c0_11, %c0_12, %c0_13], %20 {strides = array<i32>} : memref<1x3x8x128xf32, #tpu.memory_space<vmem>>, vector<1x1x8x128xf32>,
    %c0_14 = arith.constant 0 : index
    %c1 = arith.constant 1 : index
    %c0_15 = arith.constant 0 : index
    %c0_16 = arith.constant 0 : index
    %21 = vector.load %arg6[%c0_14, %c1, %c0_15, %c0_16] : memref<1x3x8x128xf32, #tpu.memory_space<vmem>>, vector<1x1x8x128xf32>
    %22 = vector.shape_cast %21 : vector<1x1x8x128xf32> to vector<8x128xf32>
    %c0_17 = arith.constant 0 : index
    %c0_18 = arith.constant 0 : index
    %23 = vector.load %arg3[%c0_17, %c0_18] : memref<8x128xf32, #tpu.memory_space<vmem>>, vector<8x128xf32>
    %24 = arith.subf %23, %3 : vector<8x128xf32>
    %25 = math.absf %24 : vector<8x128xf32>
    %cst_19 = arith.constant 1.000000e+00 : f32
    %26 = vector.broadcast %cst_19 : f32 to vector<8x128xf32>
    %27 = arith.minimumf %25, %26 : vector<8x128xf32>
    %cst_20 = arith.constant 5.000000e-01 : f32
    %28 = vector.broadcast %cst_20 : f32 to vector<8x128xf32>
    %29 = arith.mulf %28, %27 : vector<8x128xf32>
    %30 = arith.subf %25, %29 : vector<8x128xf32>
    %31 = arith.mulf %27, %30 : vector<8x128xf32>
    %32 = vector.shape_cast %31 : vector<8x128xf32> to vector<1x8x128xf32>
    %cst_21 = arith.constant dense<0.000000e+00> : vector<8x128xf32>
    %33 = vector.multi_reduction <add>, %32, %cst_21 [0] : vector<1x8x128xf32> to vector<8x128xf32>
    %34 = arith.addf %22, %33 : vector<8x128xf32>
    %c0_22 = arith.constant 0 : index
    %c1_23 = arith.constant 1 : index
    %c0_24 = arith.constant 0 : index
    %c0_25 = arith.constant 0 : index
    %35 = vector.load %arg6[%c0_22, %c1_23, %c0_24, %c0_25] : memref<1x3x8x128xf32, #tpu.memory_space<vmem>>, vector<1x1x8x128xf32>
    %36 = vector.shape_cast %35 : vector<1x1x8x128xf32> to vector<8x128xf32>
    %37 = vector.shape_cast %34 : vector<8x128xf32> to vector<1x1x8x128xf32>
    tpu.vector_store %arg6[%c0_22, %c1_23, %c0_24, %c0_25], %37 {strides = array<i32>} : memref<1x3x8x128xf32, #tpu.memory_space<vmem>>, vector<1x1x8x128xf32>,
    %c0_26 = arith.constant 0 : index
    %c2 = arith.constant 2 : index
    %c0_27 = arith.constant 0 : index
    %c0_28 = arith.constant 0 : index
    %38 = vector.load %arg6[%c0_26, %c2, %c0_27, %c0_28] : memref<1x3x8x128xf32, #tpu.memory_space<vmem>>, vector<1x1x8x128xf32>
    %39 = vector.shape_cast %38 : vector<1x1x8x128xf32> to vector<8x128xf32>
    %c0_29 = arith.constant 0 : index
    %c0_30 = arith.constant 0 : index
    %40 = vector.load %arg4[%c0_29, %c0_30] : memref<8x128xf32, #tpu.memory_space<vmem>>, vector<8x128xf32>
    %41 = arith.subf %40, %3 : vector<8x128xf32>
    %42 = math.absf %41 : vector<8x128xf32>
    %cst_31 = arith.constant 1.000000e+00 : f32
    %43 = vector.broadcast %cst_31 : f32 to vector<8x128xf32>
    %44 = arith.minimumf %42, %43 : vector<8x128xf32>
    %cst_32 = arith.constant 5.000000e-01 : f32
    %45 = vector.broadcast %cst_32 : f32 to vector<8x128xf32>
    %46 = arith.mulf %45, %44 : vector<8x128xf32>
    %47 = arith.subf %42, %46 : vector<8x128xf32>
    %48 = arith.mulf %44, %47 : vector<8x128xf32>
    %49 = vector.shape_cast %48 : vector<8x128xf32> to vector<1x8x128xf32>
    %cst_33 = arith.constant dense<0.000000e+00> : vector<8x128xf32>
    %50 = vector.multi_reduction <add>, %49, %cst_33 [0] : vector<1x8x128xf32> to vector<8x128xf32>
    %51 = arith.addf %39, %50 : vector<8x128xf32>
    %c0_34 = arith.constant 0 : index
    %c2_35 = arith.constant 2 : index
    %c0_36 = arith.constant 0 : index
    %c0_37 = arith.constant 0 : index
    %52 = vector.load %arg6[%c0_34, %c2_35, %c0_36, %c0_37] : memref<1x3x8x128xf32, #tpu.memory_space<vmem>>, vector<1x1x8x128xf32>
    %53 = vector.shape_cast %52 : vector<1x1x8x128xf32> to vector<8x128xf32>
    %54 = vector.shape_cast %51 : vector<8x128xf32> to vector<1x1x8x128xf32>
    tpu.vector_store %arg6[%c0_34, %c2_35, %c0_36, %c0_37], %54 {strides = array<i32>} : memref<1x3x8x128xf32, #tpu.memory_space<vmem>>, vector<1x1x8x128xf32>,
    return
  }
  func.func @transform_0(%arg0: i32, %arg1: i32) -> (i32, i32) {
    %c1_i32 = arith.constant 1 : i32
    %0 = arith.muli %arg0, %c1_i32 : i32
    %1 = arith.addi %0, %arg1 : i32
    %c0_i32 = arith.constant 0 : i32
    %c0_i32_0 = arith.constant 0 : i32
    return %1, %c0_i32 : i32, i32
  }
  func.func @transform_1(%arg0: i32, %arg1: i32) -> (i32, i32) {
    %c1_i32 = arith.constant 1 : i32
    %0 = arith.muli %arg0, %c1_i32 : i32
    %1 = arith.addi %0, %arg1 : i32
    %c0_i32 = arith.constant 0 : i32
    %c0_i32_0 = arith.constant 0 : i32
    return %1, %c0_i32 : i32, i32
  }
  func.func @transform_2(%arg0: i32, %arg1: i32) -> (i32, i32) {
    %c1_i32 = arith.constant 1 : i32
    %0 = arith.muli %arg0, %c1_i32 : i32
    %1 = arith.addi %0, %arg1 : i32
    %c0_i32 = arith.constant 0 : i32
    %c0_i32_0 = arith.constant 0 : i32
    return %1, %c0_i32 : i32, i32
  }
  func.func @transform_3(%arg0: i32, %arg1: i32) -> (i32, i32) {
    %c1_i32 = arith.constant 1 : i32
    %0 = arith.muli %arg0, %c1_i32 : i32
    %1 = arith.addi %0, %arg1 : i32
    %c0_i32 = arith.constant 0 : i32
    %c0_i32_0 = arith.constant 0 : i32
    return %1, %c0_i32 : i32, i32
  }
  func.func @transform_4(%arg0: i32, %arg1: i32) -> (i32, i32, i32, i32) {
    %c0_i32 = arith.constant 0 : i32
    %c0_i32_0 = arith.constant 0 : i32
    %c0_i32_1 = arith.constant 0 : i32
    %c0_i32_2 = arith.constant 0 : i32
    return %arg0, %c0_i32, %c0_i32_0, %c0_i32_1 : i32, i32, i32, i32
  }
}

</mosaic_0001>

<llo_original>
// kernel: tpu_custom_call.1
$region0: #{tpu_custom_call.1}
  #allocation0 [shape = 'u32[]', space=smem, size = 0x4, offset = 0x4, fixed_abs, tag = 'smem constant byte address 0x4 - core index']
  #allocation1 [shape = 'u32[144,128]{1,0:T(1,128)}', space=vmem, size = 0x12000, scoped, tag = 'internal scratch']
  %s0 = inlined_call_operand.hbm [shape: f32[8,128], index: 0, kind: input, shape index: {}]
  %s1 = inlined_call_operand.hbm [shape: f32[8,128], index: 1, kind: input, shape index: {}]
  %s2 = inlined_call_operand.hbm [shape: f32[8,128], index: 2, kind: input, shape index: {}]
  %s3 = inlined_call_operand.vmem [shape: f32[8,128], index: 3, kind: input, shape index: {}]
  %s4 = inlined_call_operand.hbm [shape: f32[1,3,8,128], index: 4, kind: output, shape index: {}]
  %s5 = sld [smem:[#allocation0]]
  $region42: #{tpu_custom_call.1} parent=0
    _
  %s7 = ssub.s32 1, %s5
  %s8 = scalar_select 0, %s7, %s5
  $region1: #{tpu_custom_call.1} parent=0
    #allocation2 [shape = 'u8[4096]{0}', space=vmem, size = 0x1000, scoped, tag = 'input window, operand 0, single buffered']
    #allocation3 [shape = 's32[1]{0}', space=sflag, size = 0x4, scoped, tag = 'scoped memory for tpu_custom_call.1']
    #allocation4 [shape = 's32[1]{0}', space=sflag, size = 0x4, scoped, tag = 'scoped memory for tpu_custom_call.1']
    #allocation5 [shape = 'u8[4096]{0}', space=vmem, size = 0x1000, scoped, tag = 'input window, operand 1, single buffered']
    #allocation6 [shape = 's32[1]{0}', space=sflag, size = 0x4, scoped, tag = 'scoped memory for tpu_custom_call.1']
    #allocation7 [shape = 'u8[4096]{0}', space=vmem, size = 0x1000, scoped, tag = 'input window, operand 2, single buffered']
    #allocation8 [shape = 'u8[12288]{0}', space=vmem, size = 0x3000, scoped, tag = 'output window, operand 0, single buffered']
    %9 = vsyncpa [#allocation3], 0
    %10 = vsyncpa [#allocation6], 0
    %11 = vsyncpa [#allocation4], 0
    // Predicated region
    $region2: #{tpu_custom_call.1} parent=1 // pred_check
      _
    $region3: #{tpu_custom_call.1} parent=1 // pred_check_branch
      %13 = sbr.rel (0) target = $region5
    $region4: #{tpu_custom_call.1} parent=1 // pred_region
      %s14 = sadd.s32 0, 0
      %s16 = ssub.s32 128, 128
      %17 = vsyncadd [#allocation3], %s16
      %s18 = smul.addr %s14, 128
      %s19 = scalar_lea.hbm %s0, %s18
      %s21 = sshll.u32 [#allocation2], 4
      %s22 = int_to_ptr.vmem [resolvable:$true] %s21
      %24 = dma.hbm_to_vmem [thread:$0]  %s19, 128, %s22, [#allocation3]
    $region5: #{tpu_custom_call.1} parent=1 // pred_fallthru
      _
    // Predicated region
    $region6: #{tpu_custom_call.1} parent=1 // pred_check
      _
    $region7: #{tpu_custom_call.1} parent=1 // pred_check_branch
      %26 = sbr.rel (0) target = $region9
    $region8: #{tpu_custom_call.1} parent=1 // pred_region
      %s27 = sadd.s32 0, 0
      %s29 = ssub.s32 128, 128
      %30 = vsyncadd [#allocation6], %s29
      %s31 = smul.addr %s27, 128
      %s32 = scalar_lea.hbm %s1, %s31
      %s34 = sshll.u32 [#allocation5], 4
      %s35 = int_to_ptr.vmem [resolvable:$true] %s34
      %37 = dma.hbm_to_vmem [thread:$0]  %s32, 128, %s35, [#allocation6]
    $region9: #{tpu_custom_call.1} parent=1 // pred_fallthru
      _
    // Predicated region
    $region10: #{tpu_custom_call.1} parent=1 // pred_check
      _
    $region11: #{tpu_custom_call.1} parent=1 // pred_check_branch
      %39 = sbr.rel (0) target = $region13
    $region12: #{tpu_custom_call.1} parent=1 // pred_region
      %s40 = sadd.s32 0, 0
      %s42 = ssub.s32 128, 128
      %43 = vsyncadd [#allocation6], %s42
      %s44 = smul.addr %s40, 128
      %s45 = scalar_lea.hbm %s2, %s44
      %s47 = sshll.u32 [#allocation7], 4
      %s48 = int_to_ptr.vmem [resolvable:$true] %s47
      %50 = dma.hbm_to_vmem [thread:$0]  %s45, 128, %s48, [#allocation6]
    $region13: #{tpu_custom_call.1} parent=1 // pred_fallthru
      _
    // Predicated region
    $region14: #{tpu_custom_call.1} parent=1 // pred_check
      _
    $region15: #{tpu_custom_call.1} parent=1 // pred_check_branch
      %52 = sbr.rel (0) target = $region17
    $region16: #{tpu_custom_call.1} parent=1 // pred_region
      %s53 = sadd.s32 0, 0
      %p54 = scmp.lt.s32.totalorder %s53, 0
      %s55 = scalar_select %p54, %s53, 0
      %s56 = smul.addr %s55, 8
      %s57 = scalar_lea.vmem %s3, %s56
      %s58 = sadd.s32 0, 0
    $region17: #{tpu_custom_call.1} parent=1 // pred_fallthru
      _
    // Predicated region
    $region18: #{tpu_custom_call.1} parent=1 // pred_check
      _
    $region19: #{tpu_custom_call.1} parent=1 // pred_check_branch
      %60 = sbr.rel (0) target = $region21
    $region20: #{tpu_custom_call.1} parent=1 // pred_region
      %61 = dma.done [#allocation3], 128
    $region21: #{tpu_custom_call.1} parent=1 // pred_fallthru
      _
    // Predicated region
    $region22: #{tpu_custom_call.1} parent=1 // pred_check
      _
    $region23: #{tpu_custom_call.1} parent=1 // pred_check_branch
      %63 = sbr.rel (0) target = $region25
    $region24: #{tpu_custom_call.1} parent=1 // pred_region
      %64 = dma.done [#allocation6], 128
    $region25: #{tpu_custom_call.1} parent=1 // pred_fallthru
      _
    // Predicated region
    $region26: #{tpu_custom_call.1} parent=1 // pred_check
      _
    $region27: #{tpu_custom_call.1} parent=1 // pred_check_branch
      %66 = sbr.rel (0) target = $region29
    $region28: #{tpu_custom_call.1} parent=1 // pred_region
      %67 = dma.done [#allocation6], 128
    $region29: #{tpu_custom_call.1} parent=1 // pred_fallthru
      _
    %s68 = sadd.s32 0, 0
    %p69 = scmp.lt.s32.totalorder %s68, 0
    %s70 = scalar_select %p69, %s68, 0
    %s71 = smul.addr %s70, 8
    %s72 = scalar_lea.vmem %s3, %s71
    %s73 = sadd.s32 0, 0
    %s74 = sadd.s32 0, 0
    %s75 = sadd.s32 0, 0
    %s76 = sadd.s32 0, 0
    %p77 = scmp.lt.s32.totalorder %s76, 0
    %s78 = scalar_select %p77, %s76, 0
    %s79 = smul.addr %s78, 8
    %s80 = scalar_lea.vmem %s3, %s79
    %s81 = sadd.s32 0, 0
    %p82 = scmp.eq.s32.totalorder 0, 0
    // Predicated region
    $region30: #{tpu_custom_call.1} parent=1 // pred_check
      %p83 = pneg %p82
    $region31: #{tpu_custom_call.1} parent=1 // pred_check_branch
      %85 = sbr.rel (%p83) target = $region33
    $region32: #{tpu_custom_call.1} parent=1 // pred_region
      %86 = vst [vmem:[#allocation8] sm:$0xff] 0.0
      %87 = vst [vmem:[#allocation8 + $0x8] sm:$0xff] 0.0
      %88 = vst [vmem:[#allocation8 + $0x10] sm:$0xff] 0.0
    $region33: #{tpu_custom_call.1} parent=1 // pred_fallthru
      _
    %v89 = vld [vmem:[%s80] sm:$0xff]
    %v90 = vld [vmem:[#allocation8] sm:$0xff]
    %v91 = vld [vmem:[#allocation2] sm:$0xff]
    %v92 = vsub.f32 %v91, %v89
    %v93 = vand.u32 2147483647, %v92
    %v94 = vmin.f32 %v93, 1.0
    %v95 = vmul.f32 %v94, 0.5
    %v96 = vsub.f32 %v93, %v95
    %v97 = vmul.f32 %v94, %v96
    %v98 = vadd.f32 %v97, 0.0
    %v99 = vadd.f32 %v90, %v98
    %100 = vst [vmem:[#allocation8] sm:$0xff] %v99
    %s101 = scalar_lea.vmem [#allocation8], 8
    %v102 = vld [vmem:[%s101] sm:$0xff]
    %v103 = vld [vmem:[#allocation5] sm:$0xff]
    %v104 = vsub.f32 %v103, %v89
    %v105 = vand.u32 2147483647, %v104
    %v106 = vmin.f32 %v105, 1.0
    %v107 = vmul.f32 %v106, 0.5
    %v108 = vsub.f32 %v105, %v107
    %v109 = vmul.f32 %v106, %v108
    %v110 = vadd.f32 %v109, 0.0
    %v111 = vadd.f32 %v102, %v110
    %112 = vst [vmem:[%s101] sm:$0xff] %v111
    %s113 = scalar_lea.vmem [#allocation8], 16
    %v114 = vld [vmem:[%s113] sm:$0xff]
    %v115 = vld [vmem:[#allocation7] sm:$0xff]
    %v116 = vsub.f32 %v115, %v89
    %v117 = vand.u32 2147483647, %v116
    %v118 = vmin.f32 %v117, 1.0
    %v119 = vmul.f32 %v118, 0.5
    %v120 = vsub.f32 %v117, %v119
    %v121 = vmul.f32 %v118, %v120
    %v122 = vadd.f32 %v121, 0.0
    %v123 = vadd.f32 %v114, %v122
    %124 = vst [vmem:[%s113] sm:$0xff] %v123
    // Predicated region
    $region34: #{tpu_custom_call.1} parent=1 // pred_check
      _
    $region35: #{tpu_custom_call.1} parent=1 // pred_check_branch
      %126 = sbr.rel (0) target = $region37
    $region36: #{tpu_custom_call.1} parent=1 // pred_region
      %s128 = ssub.s32 384, 384
      %129 = vsyncadd [#allocation4], %s128
      %s130 = sshll.u32 [#allocation8], 4
      %s131 = int_to_ptr.vmem [resolvable:$true] %s130
      %136 = dma.vmem_to_hbm [thread:$0]  %s131, 384, %s4, [#allocation4], 128, 128, 8
    $region37: #{tpu_custom_call.1} parent=1 // pred_fallthru
      _
    // Predicated region
    $region38: #{tpu_custom_call.1} parent=1 // pred_check
      _
    $region39: #{tpu_custom_call.1} parent=1 // pred_check_branch
      %138 = sbr.rel (0) target = $region41
    $region40: #{tpu_custom_call.1} parent=1 // pred_region
      %139 = dma.done [#allocation4], 384
    $region41: #{tpu_custom_call.1} parent=1 // pred_fallthru
      _
    %140 = vsyncpa [#allocation3], 1
    %141 = vsyncpa [#allocation6], 1
    %142 = vsyncpa [#allocation4], 1

</llo_original>
